<compile_context>
chip_gen: v5e
topology: v5e:2x2
jax: 0.10.0
libtpu: 0.0.40
codegen_flags: <defaults>
</compile_context>

<pallas_src>
import math
import numpy as np

import jax
import jax.numpy as jnp
from jax import lax
from jax.experimental import pallas as pl
from jax.experimental.pallas import tpu as pltpu

# ---- module hyper-parameters (consistent with the torch module) ----
DIM = 4
K = 32
B_TAIL = 3.0
HIDDEN = 32                  # torch default is 800; small synthetic hidden size
HID3 = (DIM - 1) * HIDDEN    # 96: the three conditioner MLPs fused side by side
LANES = DIM * K              # 128: one full f32 vreg of lanes

# ---- RQS constants (DEFAULT_* from the reference implementation) ----
MIN_BIN_WIDTH = 1e-3
MIN_BIN_HEIGHT = 1e-3
MIN_DERIVATIVE = 1e-3
EPS = 1e-6


def _structural_mats():
    """Constant 0/1 matrices driving per-block cumsum / sum / gather on the MXU."""
    r = np.arange(LANES)
    blk = r // K
    same = blk[:, None] == blk[None, :]
    blocksum = same.astype(np.float32)                                        # (128,128)
    tri_blk = (same & (r[:, None] <= r[None, :])).astype(np.float32)          # (128,128)
    reduce_mat = (blk[:, None] == np.arange(DIM)[None, :]).astype(np.float32)  # (128,4)
    expand_mat = np.ascontiguousarray(reduce_mat.T)                           # (4,128)
    return blocksum, tri_blk, reduce_mat, expand_mat


_BLOCKSUM, _TRI_BLK, _REDUCE, _EXPAND = _structural_mats()


# ----------------------------------------------------------------------------
# Fused kernel: fused conditioner MLPs + lane-packed rational-quadratic splines
# ----------------------------------------------------------------------------
def nsf_ar_kernel(x_ref, feats_ref, w1_ref, b1_ref, w2_ref, b2_ref, w3_ref, b3_ref,
                  bsum_ref, tri_ref, red_ref, exp_ref, z_ref, ld_ref):
    f32 = jnp.float32
    left, right = -B_TAIL, B_TAIL
    scale = right - left                      # = 2*B, the reference's softmax scale

    x = x_ref[...]                            # (tile, DIM)
    feats = feats_ref[...]                    # (tile, 2*DIM) = [cos(pi x/B), sin(pi x/B)]

    # ---- fused conditioner: 3 MLPs as block-diagonal wide matmuls ----------
    h = jnp.tanh(jnp.dot(feats, w1_ref[...], preferred_element_type=f32) + b1_ref[...])
    h = jnp.tanh(jnp.dot(h, w2_ref[...], preferred_element_type=f32) + b2_ref[...])
    p = jnp.dot(h, w3_ref[...], preferred_element_type=f32) + b3_ref[...]   # (tile, 384)

    # layer-3 columns were permuted at init: p is already [w_all | h_all | d_all],
    # each a vreg-aligned 128-lane slice packing the DIM spline problems.
    w_all = p[:, 0:LANES]
    h_all = p[:, LANES:2 * LANES]
    d_all = p[:, 2 * LANES:3 * LANES]

    bsum = bsum_ref[...]          # (128,128): per-block sum, broadcast back to lanes
    tri = tri_ref[...]            # (128,128): per-block inclusive cumsum
    red = red_ref[...]            # (128,4)  : per-block reduce -> per-coordinate
    expd = exp_ref[...]           # (4,128)  : per-coordinate -> per-block broadcast

    lane = lax.broadcasted_iota(jnp.int32, (1, LANES), 1)
    lane_in_blk = lane % K
    is_first = lane_in_blk == 0
    is_last = lane_in_blk == (K - 1)

    def softmax_blk(a, stabilize):
        # Per-block softmax.  A row-global max shift is constant within every
        # block, so it leaves the block-wise softmax unchanged.  The outer call
        # has input bounded in [0, 2B] and skips the shift entirely.
        if stabilize:
            a = a - jnp.max(a, axis=-1, keepdims=True)
        e = jnp.exp(a)
        s = jnp.dot(e, bsum, preferred_element_type=f32)
        return e * pl.reciprocal(s, approx=True)

    def softplus(a):
        return jnp.maximum(a, 0.0) + jnp.log1p(jnp.exp(-jnp.abs(a)))

    # --- bin widths / knot positions (double softmax = reference quirk) -----
    widths = softmax_blk(scale * softmax_blk(w_all, True), False)
    widths = MIN_BIN_WIDTH + (1.0 - MIN_BIN_WIDTH * K) * widths
    cumw = scale * jnp.dot(widths, tri, preferred_element_type=f32) + left
    cw_hi = jnp.where(is_last, right, cumw)                      # knots 1..K
    cw_lo = jnp.where(is_first, left, cumw - scale * widths)     # knots 0..K-1
    bin_w = cw_hi - cw_lo

    heights = softmax_blk(scale * softmax_blk(h_all, True), False)
    heights = MIN_BIN_HEIGHT + (1.0 - MIN_BIN_HEIGHT * K) * heights
    cumh = scale * jnp.dot(heights, tri, preferred_element_type=f32) + left
    ch_hi = jnp.where(is_last, right, cumh)
    ch_lo = jnp.where(is_first, left, cumh - scale * heights)
    bin_h = ch_hi - ch_lo

    # knot derivatives: interior = min_d + softplus(softplus(raw)) (double
    # softplus = reference quirk); boundary knots are exactly 1.0.
    d_vals = MIN_DERIVATIVE + softplus(softplus(d_all))       # lane j: knot j+1
    d_right = jnp.where(is_last, 1.0, d_vals)                  # right knot of bin j
    d_left = jnp.where(is_first, 1.0,
                       pltpu.roll(d_vals, shift=1, axis=1))    # left knot of bin j

    # --- per-block searchsorted (x clamped so every lane stays finite) ------
    x_in = jnp.clip(x, left, right)                                    # (tile, DIM)
    x_lanes = jnp.dot(x_in, expd, preferred_element_type=f32)          # (tile, 128)
    cw_cmp = jnp.where(is_last, right + EPS, cw_hi)
    ge = (x_lanes >= cw_cmp).astype(f32)
    idx = jnp.clip(jnp.dot(ge, bsum, preferred_element_type=f32).astype(jnp.int32),
                   0, K - 1)                                    # selected bin, bcast
    onehot = (lane_in_blk == idx).astype(f32)

    # --- rational-quadratic spline, evaluated lane-packed -------------------
    # theta is clipped to [0,1]: exact on the selected lane, and keeps every
    # other lane finite so the one-hot gathers never multiply NaN by zero.
    inv_bw = 1.0 / bin_w
    theta = jnp.clip((x_lanes - cw_lo) * inv_bw, 0.0, 1.0)
    t1mt = theta * (1.0 - theta)
    delta = bin_h * inv_bw
    numer = bin_h * (delta * theta * theta + d_left * t1mt)
    denom = delta + (d_left + d_right - 2.0 * delta) * t1mt
    inv_den = 1.0 / denom
    y_lane = ch_lo + numer * inv_den
    dnum = (delta * delta) * (d_right * theta * theta
                              + 2.0 * delta * t1mt
                              + d_left * (1.0 - theta) * (1.0 - theta))
    ratio = dnum * inv_den * inv_den                   # |dy/dx| per lane (> 0)

    y = jnp.dot(y_lane * onehot, red, preferred_element_type=f32)      # (tile, DIM)
    r = jnp.dot(ratio * onehot, red, preferred_element_type=f32)       # (tile, DIM)
    lad = jnp.log(r)

    # outside the tail bound: identity transform, zero log-det
    inside = jnp.logical_and(x >= left, x <= right)
    z_ref[...] = jnp.where(inside, y, x)
    ld_ref[...] = jnp.sum(jnp.where(inside, lad, 0.0), axis=-1, keepdims=True)


# ----------------------------------------------------------------------------
# JAX wrapper: batch tiling, trig features, single gridded pallas_call
# ----------------------------------------------------------------------------
def nsf_ar_forward(x, params, *, tile=512):
    """z, log_det = NSF_AR.forward(x) for the fused/stacked parameter set."""
    (w1f, b1f, w2f, b2f, w3f, b3f) = params
    n0, dim = x.shape
    assert dim == DIM
    x = x.astype(jnp.float32)

    # batch tile: a multiple of 8 sublanes, no larger than the (padded) batch.
    tile = min(tile, ((n0 + 7) // 8) * 8)
    tile = max(8, ((tile + 7) // 8) * 8)
    n = ((n0 + tile - 1) // tile) * tile
    if n != n0:
        x = jnp.concatenate([x, jnp.zeros((n - n0, dim), jnp.float32)], axis=0)

    # trig features [cos(pi x / B), sin(pi x / B)] for all coordinates; the
    # fused layer-1 weights zero the columns each conditioner must not see.
    # TODO(synk): fold cos/sin into the kernel once in-kernel trig lowering is
    # guaranteed on all Mosaic versions; it only saves an (n,8) HBM round trip.
    ang = (math.pi / B_TAIL) * x
    feats = jnp.concatenate([jnp.cos(ang), jnp.sin(ang)], axis=-1)     # (n, 2*DIM)

    weights = [w1f, b1f, w2f, b2f, w3f, b3f]
    consts = [jnp.asarray(_BLOCKSUM), jnp.asarray(_TRI_BLK),
              jnp.asarray(_REDUCE), jnp.asarray(_EXPAND)]

    batch2 = lambda i: (i, 0)
    const2 = lambda i: (0, 0)
    in_specs = ([pl.BlockSpec((tile, DIM), batch2),
                 pl.BlockSpec((tile, 2 * DIM), batch2)]
                + [pl.BlockSpec(a.shape, const2) for a in weights]
                + [pl.BlockSpec(a.shape, const2) for a in consts])

    z, ld = pl.pallas_call(
        nsf_ar_kernel,
        grid=(n // tile,),
        out_shape=(jax.ShapeDtypeStruct((n, DIM), jnp.float32),
                   jax.ShapeDtypeStruct((n, 1), jnp.float32)),
        in_specs=in_specs,
        out_specs=(pl.BlockSpec((tile, DIM), batch2),
                   pl.BlockSpec((tile, 1), batch2)),
        compiler_params=pltpu.CompilerParams(
            dimension_semantics=("parallel",),
            vmem_limit_bytes=32 * 1024 * 1024),
    )(x, feats, *weights, *consts)
    return z[:n0], ld[:n0, 0]


# ----------------------------------------------------------------------------
# Parameter init: per-step FCNN weights fused block-diagonally at init time,
# layer-3 columns permuted into the packed [W | H | D] lane layout, and the
# coordinate-0 init_param folded into the layer-3 bias.  nn.Linear default init.
# ----------------------------------------------------------------------------
def init_params(key):
    kdim = 3 * K - 1                      # 95
    keys = jax.random.split(key, 1 + 6 * (DIM - 1))

    w1f = jnp.zeros((2 * DIM, HID3), jnp.float32)     # rows: cos(x_j), sin(x_j)
    b1f = jnp.zeros((1, HID3), jnp.float32)
    w2f = jnp.zeros((HID3, HID3), jnp.float32)         # block diagonal
    b2f = jnp.zeros((1, HID3), jnp.float32)
    w3f = jnp.zeros((HID3, 3 * LANES), jnp.float32)    # packed [W | H | D] columns
    b3f = jnp.zeros((1, 3 * LANES), jnp.float32)

    # coordinate 0: init.uniform_(init_param, -1/2, 1/2) folded into the bias
    init_param = jax.random.uniform(keys[0], (kdim,), jnp.float32, -0.5, 0.5)
    b3f = b3f.at[0, 0:K].set(init_param[0:K])
    b3f = b3f.at[0, LANES:LANES + K].set(init_param[K:2 * K])
    b3f = b3f.at[0, 2 * LANES:2 * LANES + K - 1].set(init_param[2 * K:kdim])

    idx = 1
    for s in range(DIM - 1):
        i = s + 1                          # conditioner for coordinate i
        fan_in = 2 * i
        hcol = slice(HIDDEN * s, HIDDEN * (s + 1))
        # layer 1 (fan_in -> hidden); cos(x_j) -> row j, sin(x_j) -> row DIM+j
        bnd = 1.0 / math.sqrt(fan_in)
        w1 = jax.random.uniform(keys[idx], (fan_in, HIDDEN), jnp.float32, -bnd, bnd)
        b1 = jax.random.uniform(keys[idx + 1], (HIDDEN,), jnp.float32, -bnd, bnd)
        w1f = w1f.at[0:i, hcol].set(w1[0:i])
        w1f = w1f.at[DIM:DIM + i, hcol].set(w1[i:2 * i])
        b1f = b1f.at[0, hcol].set(b1)
        # layer 2 (hidden -> hidden), block diagonal
        bnd = 1.0 / math.sqrt(HIDDEN)
        w2f = w2f.at[hcol, hcol].set(jax.random.uniform(
            keys[idx + 2], (HIDDEN, HIDDEN), jnp.float32, -bnd, bnd))
        b2f = b2f.at[0, hcol].set(jax.random.uniform(
            keys[idx + 3], (HIDDEN,), jnp.float32, -bnd, bnd))
        # layer 3 (hidden -> 3K-1), columns permuted into packed lane blocks
        w3 = jax.random.uniform(keys[idx + 4], (HIDDEN, kdim), jnp.float32, -bnd, bnd)
        b3 = jax.random.uniform(keys[idx + 5], (kdim,), jnp.float32, -bnd, bnd)
        wblk = slice(K * i, K * (i + 1))
        hblk = slice(LANES + K * i, LANES + K * (i + 1))
        dblk = slice(2 * LANES + K * i, 2 * LANES + K * i + (K - 1))
        w3f = w3f.at[hcol, wblk].set(w3[:, 0:K])
        w3f = w3f.at[hcol, hblk].set(w3[:, K:2 * K])
        w3f = w3f.at[hcol, dblk].set(w3[:, 2 * K:kdim])
        b3f = b3f.at[0, wblk].set(b3[0:K])
        b3f = b3f.at[0, hblk].set(b3[K:2 * K])
        b3f = b3f.at[0, dblk].set(b3[2 * K:kdim])
        idx += 6
    return (w1f, b1f, w2f, b2f, w3f, b3f)


if __name__ == "__main__":
    key = jax.random.PRNGKey(0)
    k_x, k_p = jax.random.split(key)
    batch = 8
    # mix of points inside and outside the tail bound +/- B
    x = 2.0 * jax.random.normal(k_x, (batch, DIM), jnp.float32)
    params = init_params(k_p)

    fwd = jax.jit(nsf_ar_forward)
    z, log_det = fwd(x, params)
    jax.block_until_ready((z, log_det))

    assert z.shape == (batch, DIM), z.shape
    assert log_det.shape == (batch,), log_det.shape
    assert bool(jnp.all(jnp.isfinite(z))) and bool(jnp.all(jnp.isfinite(log_det)))
    print("KERNEL_OK")
</pallas_src>

<mosaic_0001>
module attributes {stable_mosaic.version = 11 : i64} {
  func.func @nsf_ar_kernel(%arg0: i32, %arg1: memref<8x4xf32, #tpu.memory_space<vmem>>, %arg2: memref<8x8xf32, #tpu.memory_space<vmem>>, %arg3: memref<8x96xf32, #tpu.memory_space<vmem>>, %arg4: memref<1x96xf32, #tpu.memory_space<vmem>>, %arg5: memref<96x96xf32, #tpu.memory_space<vmem>>, %arg6: memref<1x96xf32, #tpu.memory_space<vmem>>, %arg7: memref<96x384xf32, #tpu.memory_space<vmem>>, %arg8: memref<1x384xf32, #tpu.memory_space<vmem>>, %arg9: memref<128x128xf32, #tpu.memory_space<vmem>>, %arg10: memref<128x128xf32, #tpu.memory_space<vmem>>, %arg11: memref<128x4xf32, #tpu.memory_space<vmem>>, %arg12: memref<4x128xf32, #tpu.memory_space<vmem>>, %arg13: memref<8x4xf32, #tpu.memory_space<vmem>>, %arg14: memref<8x1xf32, #tpu.memory_space<vmem>>) attributes {dimension_semantics = [#tpu.dimension_semantics<parallel>], iteration_bounds = array<i64: 1>, scalar_prefetch = 0 : i64, scratch_operands = 0 : i64, tpu.core_type = #tpu.core_type<tc>, window_params = [{transform_indices = @transform_0, window_bounds = array<i64: 8, 4>}, {transform_indices = @transform_1, window_bounds = array<i64: 8, 8>}, {pipeline_mode = #tpu.pipeline_mode<synchronous>, transform_indices = @transform_2, window_bounds = array<i64: 8, 96>}, {pipeline_mode = #tpu.pipeline_mode<synchronous>, transform_indices = @transform_3, window_bounds = array<i64: 1, 96>}, {pipeline_mode = #tpu.pipeline_mode<synchronous>, transform_indices = @transform_4, window_bounds = array<i64: 96, 96>}, {pipeline_mode = #tpu.pipeline_mode<synchronous>, transform_indices = @transform_5, window_bounds = array<i64: 1, 96>}, {pipeline_mode = #tpu.pipeline_mode<synchronous>, transform_indices = @transform_6, window_bounds = array<i64: 96, 384>}, {pipeline_mode = #tpu.pipeline_mode<synchronous>, transform_indices = @transform_7, window_bounds = array<i64: 1, 384>}, {pipeline_mode = #tpu.pipeline_mode<synchronous>, transform_indices = @transform_8, window_bounds = array<i64: 128, 128>}, {pipeline_mode = #tpu.pipeline_mode<synchronous>, transform_indices = @transform_9, window_bounds = array<i64: 128, 128>}, {pipeline_mode = #tpu.pipeline_mode<synchronous>, transform_indices = @transform_10, window_bounds = array<i64: 128, 4>}, {pipeline_mode = #tpu.pipeline_mode<synchronous>, transform_indices = @transform_11, window_bounds = array<i64: 4, 128>}, {transform_indices = @transform_12, window_bounds = array<i64: 8, 4>}, {transform_indices = @transform_13, window_bounds = array<i64: 8, 1>}]} {
    %c0 = arith.constant 0 : index
    %c0_0 = arith.constant 0 : index
    %0 = vector.load %arg1[%c0, %c0_0] : memref<8x4xf32, #tpu.memory_space<vmem>>, vector<8x4xf32>
    %c0_1 = arith.constant 0 : index
    %c0_2 = arith.constant 0 : index
    %1 = vector.load %arg2[%c0_1, %c0_2] : memref<8x8xf32, #tpu.memory_space<vmem>>, vector<8x8xf32>
    %c0_3 = arith.constant 0 : index
    %c0_4 = arith.constant 0 : index
    %2 = vector.load %arg3[%c0_3, %c0_4] : memref<8x96xf32, #tpu.memory_space<vmem>>, vector<8x96xf32>
    %cst = arith.constant dense<0.000000e+00> : vector<8x96xf32>
    %3 = tpu.matmul %1, %2, %cst {dimension_numbers = #tpu.dot_dimension_numbers<[1], [0], [0], [1], [0, 0, 1, 1], [], []>} : vector<8x8xf32>, vector<8x96xf32>, vector<8x96xf32> -> vector<8x96xf32>
    %c0_5 = arith.constant 0 : index
    %c0_6 = arith.constant 0 : index
    %4 = vector.load %arg4[%c0_5, %c0_6] : memref<1x96xf32, #tpu.memory_space<vmem>>, vector<1x96xf32>
    %5 = vector.broadcast %4 : vector<1x96xf32> to vector<8x96xf32>
    %6 = arith.addf %3, %5 : vector<8x96xf32>
    %7 = math.tanh %6 : vector<8x96xf32>
    %c0_7 = arith.constant 0 : index
    %c0_8 = arith.constant 0 : index
    %8 = vector.load %arg5[%c0_7, %c0_8] : memref<96x96xf32, #tpu.memory_space<vmem>>, vector<96x96xf32>
    %cst_9 = arith.constant dense<0.000000e+00> : vector<8x96xf32>
    %9 = tpu.matmul %7, %8, %cst_9 {dimension_numbers = #tpu.dot_dimension_numbers<[1], [0], [0], [1], [0, 0, 1, 1], [], []>} : vector<8x96xf32>, vector<96x96xf32>, vector<8x96xf32> -> vector<8x96xf32>
    %c0_10 = arith.constant 0 : index
    %c0_11 = arith.constant 0 : index
    %10 = vector.load %arg6[%c0_10, %c0_11] : memref<1x96xf32, #tpu.memory_space<vmem>>, vector<1x96xf32>
    %11 = vector.broadcast %10 : vector<1x96xf32> to vector<8x96xf32>
    %12 = arith.addf %9, %11 : vector<8x96xf32>
    %13 = math.tanh %12 : vector<8x96xf32>
    %c0_12 = arith.constant 0 : index
    %c0_13 = arith.constant 0 : index
    %14 = vector.load %arg7[%c0_12, %c0_13] : memref<96x384xf32, #tpu.memory_space<vmem>>, vector<96x384xf32>
    %cst_14 = arith.constant dense<0.000000e+00> : vector<8x384xf32>
    %15 = tpu.matmul %13, %14, %cst_14 {dimension_numbers = #tpu.dot_dimension_numbers<[1], [0], [0], [1], [0, 0, 1, 1], [], []>} : vector<8x96xf32>, vector<96x384xf32>, vector<8x384xf32> -> vector<8x384xf32>
    %c0_15 = arith.constant 0 : index
    %c0_16 = arith.constant 0 : index
    %16 = vector.load %arg8[%c0_15, %c0_16] : memref<1x384xf32, #tpu.memory_space<vmem>>, vector<1x384xf32>
    %17 = vector.broadcast %16 : vector<1x384xf32> to vector<8x384xf32>
    %18 = arith.addf %15, %17 : vector<8x384xf32>
    %19 = vector.extract_strided_slice %18 {offsets = [0, 0], sizes = [8, 128], strides = [1, 1]} : vector<8x384xf32> to vector<8x128xf32>
    %20 = vector.extract_strided_slice %18 {offsets = [0, 128], sizes = [8, 128], strides = [1, 1]} : vector<8x384xf32> to vector<8x128xf32>
    %21 = vector.extract_strided_slice %18 {offsets = [0, 256], sizes = [8, 128], strides = [1, 1]} : vector<8x384xf32> to vector<8x128xf32>
    %c0_17 = arith.constant 0 : index
    %c0_18 = arith.constant 0 : index
    %22 = vector.load %arg9[%c0_17, %c0_18] : memref<128x128xf32, #tpu.memory_space<vmem>>, vector<128x128xf32>
    %c0_19 = arith.constant 0 : index
    %c0_20 = arith.constant 0 : index
    %23 = vector.load %arg10[%c0_19, %c0_20] : memref<128x128xf32, #tpu.memory_space<vmem>>, vector<128x128xf32>
    %c0_21 = arith.constant 0 : index
    %c0_22 = arith.constant 0 : index
    %24 = vector.load %arg11[%c0_21, %c0_22] : memref<128x4xf32, #tpu.memory_space<vmem>>, vector<128x4xf32>
    %c0_23 = arith.constant 0 : index
    %c0_24 = arith.constant 0 : index
    %25 = vector.load %arg12[%c0_23, %c0_24] : memref<4x128xf32, #tpu.memory_space<vmem>>, vector<4x128xf32>
    %26 = tpu.iota {dimensions = array<i32: 1>} : vector<1x128xi32>
    %c32_i32 = arith.constant 32 : i32
    %c0_i32 = arith.constant 0 : i32
    %27 = arith.cmpi eq, %c32_i32, %c0_i32 : i32
    %c1_i32 = arith.constant 1 : i32
    %28 = arith.select %27, %c1_i32, %c32_i32 : i32
    %29 = vector.broadcast %28 : i32 to vector<1x128xi32>
    %30 = arith.remsi %26, %29 : vector<1x128xi32>
    %c0_i32_25 = arith.constant 0 : i32
    %31 = vector.broadcast %c0_i32_25 : i32 to vector<1x128xi32>
    %32 = arith.cmpi ne, %30, %31 : vector<1x128xi32>
    %c0_i32_26 = arith.constant 0 : i32
    %33 = vector.broadcast %c0_i32_26 : i32 to vector<1x128xi32>
    %34 = arith.cmpi slt, %30, %33 : vector<1x128xi32>
    %c0_i32_27 = arith.constant 0 : i32
    %35 = arith.cmpi slt, %28, %c0_i32_27 : i32
    %36 = vector.broadcast %35 : i1 to vector<1x128xi1>
    %37 = vector.broadcast %36 : vector<1x128xi1> to vector<1x128xi1>
    %38 = arith.xori %34, %37 : vector<1x128xi1>
    %39 = arith.andi %38, %32 : vector<1x128xi1>
    %40 = vector.broadcast %28 : i32 to vector<1x128xi32>
    %41 = arith.addi %30, %40 : vector<1x128xi32>
    %42 = arith.select %39, %41, %30 : vector<1x128xi1>, vector<1x128xi32>
    %c0_i32_28 = arith.constant 0 : i32
    %43 = vector.broadcast %c0_i32_28 : i32 to vector<1x128xi32>
    %44 = arith.cmpi eq, %42, %43 : vector<1x128xi32>
    %c31_i32 = arith.constant 31 : i32
    %45 = vector.broadcast %c31_i32 : i32 to vector<1x128xi32>
    %46 = arith.cmpi eq, %42, %45 : vector<1x128xi32>
    %cst_29 = arith.constant dense<0xFF800000> : vector<8xf32>
    %47 = vector.multi_reduction <maximumf>, %19, %cst_29 [1] : vector<8x128xf32> to vector<8xf32>
    %48 = vector.shape_cast %47 : vector<8xf32> to vector<8x1xf32>
    %49 = vector.broadcast %48 : vector<8x1xf32> to vector<8x128xf32>
    %50 = arith.subf %19, %49 : vector<8x128xf32>
    %51 = math.exp %50 : vector<8x128xf32>
    %cst_30 = arith.constant dense<0.000000e+00> : vector<8x128xf32>
    %52 = tpu.matmul %51, %22, %cst_30 {dimension_numbers = #tpu.dot_dimension_numbers<[1], [0], [0], [1], [0, 0, 1, 1], [], []>} : vector<8x128xf32>, vector<128x128xf32>, vector<8x128xf32> -> vector<8x128xf32>
    %53 = tpu.reciprocal %52 {approx = true} : vector<8x128xf32> -> vector<8x128xf32>
    %54 = arith.mulf %51, %53 : vector<8x128xf32>
    %cst_31 = arith.constant 6.000000e+00 : f32
    %55 = vector.broadcast %cst_31 : f32 to vector<8x128xf32>
    %56 = arith.mulf %55, %54 : vector<8x128xf32>
    %57 = math.exp %56 : vector<8x128xf32>
    %cst_32 = arith.constant dense<0.000000e+00> : vector<8x128xf32>
    %58 = tpu.matmul %57, %22, %cst_32 {dimension_numbers = #tpu.dot_dimension_numbers<[1], [0], [0], [1], [0, 0, 1, 1], [], []>} : vector<8x128xf32>, vector<128x128xf32>, vector<8x128xf32> -> vector<8x128xf32>
    %59 = tpu.reciprocal %58 {approx = true} : vector<8x128xf32> -> vector<8x128xf32>
    %60 = arith.mulf %57, %59 : vector<8x128xf32>
    %cst_33 = arith.constant 0.967999994 : f32
    %61 = vector.broadcast %cst_33 : f32 to vector<8x128xf32>
    %62 = arith.mulf %61, %60 : vector<8x128xf32>
    %cst_34 = arith.constant 1.000000e-03 : f32
    %63 = vector.broadcast %cst_34 : f32 to vector<8x128xf32>
    %64 = arith.addf %63, %62 : vector<8x128xf32>
    %cst_35 = arith.constant dense<0.000000e+00> : vector<8x128xf32>
    %65 = tpu.matmul %64, %23, %cst_35 {dimension_numbers = #tpu.dot_dimension_numbers<[1], [0], [0], [1], [0, 0, 1, 1], [], []>} : vector<8x128xf32>, vector<128x128xf32>, vector<8x128xf32> -> vector<8x128xf32>
    %cst_36 = arith.constant 6.000000e+00 : f32
    %66 = vector.broadcast %cst_36 : f32 to vector<8x128xf32>
    %67 = arith.mulf %66, %65 : vector<8x128xf32>
    %cst_37 = arith.constant -3.000000e+00 : f32
    %68 = vector.broadcast %cst_37 : f32 to vector<8x128xf32>
    %69 = arith.addf %67, %68 : vector<8x128xf32>
    %cst_38 = arith.constant 3.000000e+00 : f32
    %70 = vector.shape_cast %46 : vector<1x128xi1> to vector<1x128xi1>
    %71 = vector.broadcast %70 : vector<1x128xi1> to vector<8x128xi1>
    %72 = vector.broadcast %cst_38 : f32 to vector<8x128xf32>
    %73 = arith.select %71, %72, %69 : vector<8x128xi1>, vector<8x128xf32>
    %cst_39 = arith.constant 6.000000e+00 : f32
    %74 = vector.broadcast %cst_39 : f32 to vector<8x128xf32>
    %75 = arith.mulf %74, %64 : vector<8x128xf32>
    %76 = arith.subf %69, %75 : vector<8x128xf32>
    %cst_40 = arith.constant -3.000000e+00 : f32
    %77 = vector.shape_cast %44 : vector<1x128xi1> to vector<1x128xi1>
    %78 = vector.broadcast %77 : vector<1x128xi1> to vector<8x128xi1>
    %79 = vector.broadcast %cst_40 : f32 to vector<8x128xf32>
    %80 = arith.select %78, %79, %76 : vector<8x128xi1>, vector<8x128xf32>
    %81 = arith.subf %73, %80 : vector<8x128xf32>
    %cst_41 = arith.constant dense<0xFF800000> : vector<8xf32>
    %82 = vector.multi_reduction <maximumf>, %20, %cst_41 [1] : vector<8x128xf32> to vector<8xf32>
    %83 = vector.shape_cast %82 : vector<8xf32> to vector<8x1xf32>
    %84 = vector.broadcast %83 : vector<8x1xf32> to vector<8x128xf32>
    %85 = arith.subf %20, %84 : vector<8x128xf32>
    %86 = math.exp %85 : vector<8x128xf32>
    %cst_42 = arith.constant dense<0.000000e+00> : vector<8x128xf32>
    %87 = tpu.matmul %86, %22, %cst_42 {dimension_numbers = #tpu.dot_dimension_numbers<[1], [0], [0], [1], [0, 0, 1, 1], [], []>} : vector<8x128xf32>, vector<128x128xf32>, vector<8x128xf32> -> vector<8x128xf32>
    %88 = tpu.reciprocal %87 {approx = true} : vector<8x128xf32> -> vector<8x128xf32>
    %89 = arith.mulf %86, %88 : vector<8x128xf32>
    %cst_43 = arith.constant 6.000000e+00 : f32
    %90 = vector.broadcast %cst_43 : f32 to vector<8x128xf32>
    %91 = arith.mulf %90, %89 : vector<8x128xf32>
    %92 = math.exp %91 : vector<8x128xf32>
    %cst_44 = arith.constant dense<0.000000e+00> : vector<8x128xf32>
    %93 = tpu.matmul %92, %22, %cst_44 {dimension_numbers = #tpu.dot_dimension_numbers<[1], [0], [0], [1], [0, 0, 1, 1], [], []>} : vector<8x128xf32>, vector<128x128xf32>, vector<8x128xf32> -> vector<8x128xf32>
    %94 = tpu.reciprocal %93 {approx = true} : vector<8x128xf32> -> vector<8x128xf32>
    %95 = arith.mulf %92, %94 : vector<8x128xf32>
    %cst_45 = arith.constant 0.967999994 : f32
    %96 = vector.broadcast %cst_45 : f32 to vector<8x128xf32>
    %97 = arith.mulf %96, %95 : vector<8x128xf32>
    %cst_46 = arith.constant 1.000000e-03 : f32
    %98 = vector.broadcast %cst_46 : f32 to vector<8x128xf32>
    %99 = arith.addf %98, %97 : vector<8x128xf32>
    %cst_47 = arith.constant dense<0.000000e+00> : vector<8x128xf32>
    %100 = tpu.matmul %99, %23, %cst_47 {dimension_numbers = #tpu.dot_dimension_numbers<[1], [0], [0], [1], [0, 0, 1, 1], [], []>} : vector<8x128xf32>, vector<128x128xf32>, vector<8x128xf32> -> vector<8x128xf32>
    %cst_48 = arith.constant 6.000000e+00 : f32
    %101 = vector.broadcast %cst_48 : f32 to vector<8x128xf32>
    %102 = arith.mulf %101, %100 : vector<8x128xf32>
    %cst_49 = arith.constant -3.000000e+00 : f32
    %103 = vector.broadcast %cst_49 : f32 to vector<8x128xf32>
    %104 = arith.addf %102, %103 : vector<8x128xf32>
    %cst_50 = arith.constant 3.000000e+00 : f32
    %105 = vector.shape_cast %46 : vector<1x128xi1> to vector<1x128xi1>
    %106 = vector.broadcast %105 : vector<1x128xi1> to vector<8x128xi1>
    %107 = vector.broadcast %cst_50 : f32 to vector<8x128xf32>
    %108 = arith.select %106, %107, %104 : vector<8x128xi1>, vector<8x128xf32>
    %cst_51 = arith.constant 6.000000e+00 : f32
    %109 = vector.broadcast %cst_51 : f32 to vector<8x128xf32>
    %110 = arith.mulf %109, %99 : vector<8x128xf32>
    %111 = arith.subf %104, %110 : vector<8x128xf32>
    %cst_52 = arith.constant -3.000000e+00 : f32
    %112 = vector.shape_cast %44 : vector<1x128xi1> to vector<1x128xi1>
    %113 = vector.broadcast %112 : vector<1x128xi1> to vector<8x128xi1>
    %114 = vector.broadcast %cst_52 : f32 to vector<8x128xf32>
    %115 = arith.select %113, %114, %111 : vector<8x128xi1>, vector<8x128xf32>
    %116 = arith.subf %108, %115 : vector<8x128xf32>
    %cst_53 = arith.constant 0.000000e+00 : f32
    %117 = vector.broadcast %cst_53 : f32 to vector<8x128xf32>
    %118 = arith.maximumf %21, %117 : vector<8x128xf32>
    %119 = math.absf %21 : vector<8x128xf32>
    %cst_54 = arith.constant 0.000000e+00 : f32
    %120 = vector.broadcast %cst_54 : f32 to vector<8x128xf32>
    %121 = arith.subf %120, %119 : vector<8x128xf32>
    %122 = math.exp %121 : vector<8x128xf32>
    %123 = math.log1p %122 : vector<8x128xf32>
    %124 = arith.addf %118, %123 : vector<8x128xf32>
    %cst_55 = arith.constant 0.000000e+00 : f32
    %125 = vector.broadcast %cst_55 : f32 to vector<8x128xf32>
    %126 = arith.maximumf %124, %125 : vector<8x128xf32>
    %127 = math.absf %124 : vector<8x128xf32>
    %cst_56 = arith.constant 0.000000e+00 : f32
    %128 = vector.broadcast %cst_56 : f32 to vector<8x128xf32>
    %129 = arith.subf %128, %127 : vector<8x128xf32>
    %130 = math.exp %129 : vector<8x128xf32>
    %131 = math.log1p %130 : vector<8x128xf32>
    %132 = arith.addf %126, %131 : vector<8x128xf32>
    %cst_57 = arith.constant 1.000000e-03 : f32
    %133 = vector.broadcast %cst_57 : f32 to vector<8x128xf32>
    %134 = arith.addf %133, %132 : vector<8x128xf32>
    %cst_58 = arith.constant 1.000000e+00 : f32
    %135 = vector.shape_cast %46 : vector<1x128xi1> to vector<1x128xi1>
    %136 = vector.broadcast %135 : vector<1x128xi1> to vector<8x128xi1>
    %137 = vector.broadcast %cst_58 : f32 to vector<8x128xf32>
    %138 = arith.select %136, %137, %134 : vector<8x128xi1>, vector<8x128xf32>
    %c1_i32_59 = arith.constant 1 : i32
    %139 = tpu.dynamic_rotate %134 by %c1_i32_59 dim 1 : vector<8x128xf32>, i32 -> vector<8x128xf32>
    %cst_60 = arith.constant 1.000000e+00 : f32
    %140 = vector.shape_cast %44 : vector<1x128xi1> to vector<1x128xi1>
    %141 = vector.broadcast %140 : vector<1x128xi1> to vector<8x128xi1>
    %142 = vector.broadcast %cst_60 : f32 to vector<8x128xf32>
    %143 = arith.select %141, %142, %139 : vector<8x128xi1>, vector<8x128xf32>
    %cst_61 = arith.constant -3.000000e+00 : f32
    %cst_62 = arith.constant 3.000000e+00 : f32
    %144 = vector.broadcast %cst_61 : f32 to vector<8x4xf32>
    %145 = arith.maximumf %144, %0 : vector<8x4xf32>
    %146 = vector.broadcast %cst_62 : f32 to vector<8x4xf32>
    %147 = arith.minimumf %146, %145 : vector<8x4xf32>
    %cst_63 = arith.constant dense<0.000000e+00> : vector<8x128xf32>
    %148 = tpu.matmul %147, %25, %cst_63 {dimension_numbers = #tpu.dot_dimension_numbers<[1], [0], [0], [1], [0, 0, 1, 1], [], []>} : vector<8x4xf32>, vector<4x128xf32>, vector<8x128xf32> -> vector<8x128xf32>
    %cst_64 = arith.constant 3.00000095 : f32
    %149 = vector.shape_cast %46 : vector<1x128xi1> to vector<1x128xi1>
    %150 = vector.broadcast %149 : vector<1x128xi1> to vector<8x128xi1>
    %151 = vector.broadcast %cst_64 : f32 to vector<8x128xf32>
    %152 = arith.select %150, %151, %73 : vector<8x128xi1>, vector<8x128xf32>
    %153 = arith.cmpf oge, %148, %152 : vector<8x128xf32>
    %154 = arith.extui %153 : vector<8x128xi1> to vector<8x128xi32>
    %155 = arith.sitofp %154 : vector<8x128xi32> to vector<8x128xf32>
    %cst_65 = arith.constant dense<0.000000e+00> : vector<8x128xf32>
    %156 = tpu.matmul %155, %22, %cst_65 {dimension_numbers = #tpu.dot_dimension_numbers<[1], [0], [0], [1], [0, 0, 1, 1], [], []>} : vector<8x128xf32>, vector<128x128xf32>, vector<8x128xf32> -> vector<8x128xf32>
    %157 = arith.fptosi %156 : vector<8x128xf32> to vector<8x128xi32>
    %c0_i32_66 = arith.constant 0 : i32
    %c31_i32_67 = arith.constant 31 : i32
    %158 = vector.broadcast %c0_i32_66 : i32 to vector<8x128xi32>
    %159 = arith.maxsi %158, %157 : vector<8x128xi32>
    %160 = vector.broadcast %c31_i32_67 : i32 to vector<8x128xi32>
    %161 = arith.minsi %160, %159 : vector<8x128xi32>
    %162 = vector.broadcast %42 : vector<1x128xi32> to vector<8x128xi32>
    %163 = arith.cmpi eq, %162, %161 : vector<8x128xi32>
    %164 = arith.extui %163 : vector<8x128xi1> to vector<8x128xi32>
    %165 = arith.sitofp %164 : vector<8x128xi32> to vector<8x128xf32>
    %cst_68 = arith.constant 1.000000e+00 : f32
    %166 = vector.broadcast %cst_68 : f32 to vector<8x128xf32>
    %167 = arith.divf %166, %81 : vector<8x128xf32>
    %168 = arith.subf %148, %80 : vector<8x128xf32>
    %169 = arith.mulf %168, %167 : vector<8x128xf32>
    %cst_69 = arith.constant 0.000000e+00 : f32
    %cst_70 = arith.constant 1.000000e+00 : f32
    %170 = vector.broadcast %cst_69 : f32 to vector<8x128xf32>
    %171 = arith.maximumf %170, %169 : vector<8x128xf32>
    %172 = vector.broadcast %cst_70 : f32 to vector<8x128xf32>
    %173 = arith.minimumf %172, %171 : vector<8x128xf32>
    %cst_71 = arith.constant 1.000000e+00 : f32
    %174 = vector.broadcast %cst_71 : f32 to vector<8x128xf32>
    %175 = arith.subf %174, %173 : vector<8x128xf32>
    %176 = arith.mulf %173, %175 : vector<8x128xf32>
    %177 = arith.mulf %116, %167 : vector<8x128xf32>
    %178 = arith.mulf %177, %173 : vector<8x128xf32>
    %179 = arith.mulf %178, %173 : vector<8x128xf32>
    %180 = arith.mulf %143, %176 : vector<8x128xf32>
    %181 = arith.addf %179, %180 : vector<8x128xf32>
    %182 = arith.mulf %116, %181 : vector<8x128xf32>
    %183 = arith.addf %143, %138 : vector<8x128xf32>
    %cst_72 = arith.constant 2.000000e+00 : f32
    %184 = vector.broadcast %cst_72 : f32 to vector<8x128xf32>
    %185 = arith.mulf %184, %177 : vector<8x128xf32>
    %186 = arith.subf %183, %185 : vector<8x128xf32>
    %187 = arith.mulf %186, %176 : vector<8x128xf32>
    %188 = arith.addf %177, %187 : vector<8x128xf32>
    %cst_73 = arith.constant 1.000000e+00 : f32
    %189 = vector.broadcast %cst_73 : f32 to vector<8x128xf32>
    %190 = arith.divf %189, %188 : vector<8x128xf32>
    %191 = arith.mulf %182, %190 : vector<8x128xf32>
    %192 = arith.addf %115, %191 : vector<8x128xf32>
    %193 = arith.mulf %177, %177 : vector<8x128xf32>
    %194 = arith.mulf %138, %173 : vector<8x128xf32>
    %195 = arith.mulf %194, %173 : vector<8x128xf32>
    %cst_74 = arith.constant 2.000000e+00 : f32
    %196 = vector.broadcast %cst_74 : f32 to vector<8x128xf32>
    %197 = arith.mulf %196, %177 : vector<8x128xf32>
    %198 = arith.mulf %197, %176 : vector<8x128xf32>
    %199 = arith.addf %195, %198 : vector<8x128xf32>
    %cst_75 = arith.constant 1.000000e+00 : f32
    %200 = vector.broadcast %cst_75 : f32 to vector<8x128xf32>
    %201 = arith.subf %200, %173 : vector<8x128xf32>
    %202 = arith.mulf %143, %201 : vector<8x128xf32>
    %cst_76 = arith.constant 1.000000e+00 : f32
    %203 = vector.broadcast %cst_76 : f32 to vector<8x128xf32>
    %204 = arith.subf %203, %173 : vector<8x128xf32>
    %205 = arith.mulf %202, %204 : vector<8x128xf32>
    %206 = arith.addf %199, %205 : vector<8x128xf32>
    %207 = arith.mulf %193, %206 : vector<8x128xf32>
    %208 = arith.mulf %207, %190 : vector<8x128xf32>
    %209 = arith.mulf %208, %190 : vector<8x128xf32>
    %210 = arith.mulf %192, %165 : vector<8x128xf32>
    %cst_77 = arith.constant dense<0.000000e+00> : vector<8x4xf32>
    %211 = tpu.matmul %210, %24, %cst_77 {dimension_numbers = #tpu.dot_dimension_numbers<[1], [0], [0], [1], [0, 0, 1, 1], [], []>} : vector<8x128xf32>, vector<128x4xf32>, vector<8x4xf32> -> vector<8x4xf32>
    %212 = arith.mulf %209, %165 : vector<8x128xf32>
    %cst_78 = arith.constant dense<0.000000e+00> : vector<8x4xf32>
    %213 = tpu.matmul %212, %24, %cst_78 {dimension_numbers = #tpu.dot_dimension_numbers<[1], [0], [0], [1], [0, 0, 1, 1], [], []>} : vector<8x128xf32>, vector<128x4xf32>, vector<8x4xf32> -> vector<8x4xf32>
    %214 = math.log %213 : vector<8x4xf32>
    %cst_79 = arith.constant -3.000000e+00 : f32
    %215 = vector.broadcast %cst_79 : f32 to vector<8x4xf32>
    %216 = arith.cmpf oge, %0, %215 : vector<8x4xf32>
    %cst_80 = arith.constant 3.000000e+00 : f32
    %217 = vector.broadcast %cst_80 : f32 to vector<8x4xf32>
    %218 = arith.cmpf ole, %0, %217 : vector<8x4xf32>
    %219 = arith.andi %216, %218 : vector<8x4xi1>
    %220 = arith.select %219, %211, %0 : vector<8x4xi1>, vector<8x4xf32>
    %c0_81 = arith.constant 0 : index
    %c0_82 = arith.constant 0 : index
    %221 = vector.load %arg13[%c0_81, %c0_82] : memref<8x4xf32, #tpu.memory_space<vmem>>, vector<8x4xf32>
    tpu.vector_store %arg13[%c0_81, %c0_82], %220 {strides = array<i32>} : memref<8x4xf32, #tpu.memory_space<vmem>>, vector<8x4xf32>,
    %cst_83 = arith.constant 0.000000e+00 : f32
    %222 = vector.broadcast %cst_83 : f32 to vector<8x4xf32>
    %223 = arith.select %219, %214, %222 : vector<8x4xi1>, vector<8x4xf32>
    %cst_84 = arith.constant dense<0.000000e+00> : vector<8xf32>
    %224 = vector.multi_reduction <add>, %223, %cst_84 [1] : vector<8x4xf32> to vector<8xf32>
    %225 = vector.shape_cast %224 : vector<8xf32> to vector<8x1xf32>
    %c0_85 = arith.constant 0 : index
    %c0_86 = arith.constant 0 : index
    %226 = vector.load %arg14[%c0_85, %c0_86] : memref<8x1xf32, #tpu.memory_space<vmem>>, vector<8x1xf32>
    tpu.vector_store %arg14[%c0_85, %c0_86], %225 {strides = array<i32>} : memref<8x1xf32, #tpu.memory_space<vmem>>, vector<8x1xf32>,
    return
  }
  func.func @transform_0(%arg0: i32) -> (i32, i32) {
    %c0_i32 = arith.constant 0 : i32
    %c0_i32_0 = arith.constant 0 : i32
    return %arg0, %c0_i32 : i32, i32
  }
  func.func @transform_1(%arg0: i32) -> (i32, i32) {
    %c0_i32 = arith.constant 0 : i32
    %c0_i32_0 = arith.constant 0 : i32
    return %arg0, %c0_i32 : i32, i32
  }
  func.func @transform_2(%arg0: i32) -> (i32, i32) {
    %c0_i32 = arith.constant 0 : i32
    %c0_i32_0 = arith.constant 0 : i32
    %c0_i32_1 = arith.constant 0 : i32
    return %c0_i32, %c0_i32_0 : i32, i32
  }
  func.func @transform_3(%arg0: i32) -> (i32, i32) {
    %c0_i32 = arith.constant 0 : i32
    %c0_i32_0 = arith.constant 0 : i32
    %c0_i32_1 = arith.constant 0 : i32
    return %c0_i32, %c0_i32_0 : i32, i32
  }
  func.func @transform_4(%arg0: i32) -> (i32, i32) {
    %c0_i32 = arith.constant 0 : i32
    %c0_i32_0 = arith.constant 0 : i32
    %c0_i32_1 = arith.constant 0 : i32
    return %c0_i32, %c0_i32_0 : i32, i32
  }
  func.func @transform_5(%arg0: i32) -> (i32, i32) {
    %c0_i32 = arith.constant 0 : i32
    %c0_i32_0 = arith.constant 0 : i32
    %c0_i32_1 = arith.constant 0 : i32
    return %c0_i32, %c0_i32_0 : i32, i32
  }
  func.func @transform_6(%arg0: i32) -> (i32, i32) {
    %c0_i32 = arith.constant 0 : i32
    %c0_i32_0 = arith.constant 0 : i32
    %c0_i32_1 = arith.constant 0 : i32
    return %c0_i32, %c0_i32_0 : i32, i32
  }
  func.func @transform_7(%arg0: i32) -> (i32, i32) {
    %c0_i32 = arith.constant 0 : i32
    %c0_i32_0 = arith.constant 0 : i32
    %c0_i32_1 = arith.constant 0 : i32
    return %c0_i32, %c0_i32_0 : i32, i32
  }
  func.func @transform_8(%arg0: i32) -> (i32, i32) {
    %c0_i32 = arith.constant 0 : i32
    %c0_i32_0 = arith.constant 0 : i32
    %c0_i32_1 = arith.constant 0 : i32
    return %c0_i32, %c0_i32_0 : i32, i32
  }
  func.func @transform_9(%arg0: i32) -> (i32, i32) {
    %c0_i32 = arith.constant 0 : i32
    %c0_i32_0 = arith.constant 0 : i32
    %c0_i32_1 = arith.constant 0 : i32
    return %c0_i32, %c0_i32_0 : i32, i32
  }
  func.func @transform_10(%arg0: i32) -> (i32, i32) {
    %c0_i32 = arith.constant 0 : i32
    %c0_i32_0 = arith.constant 0 : i32
    %c0_i32_1 = arith.constant 0 : i32
    return %c0_i32, %c0_i32_0 : i32, i32
  }
  func.func @transform_11(%arg0: i32) -> (i32, i32) {
    %c0_i32 = arith.constant 0 : i32
    %c0_i32_0 = arith.constant 0 : i32
    %c0_i32_1 = arith.constant 0 : i32
    return %c0_i32, %c0_i32_0 : i32, i32
  }
  func.func @transform_12(%arg0: i32) -> (i32, i32) {
    %c0_i32 = arith.constant 0 : i32
    %c0_i32_0 = arith.constant 0 : i32
    return %arg0, %c0_i32 : i32, i32
  }
  func.func @transform_13(%arg0: i32) -> (i32, i32) {
    %c0_i32 = arith.constant 0 : i32
    %c0_i32_0 = arith.constant 0 : i32
    return %arg0, %c0_i32 : i32, i32
  }
}

</mosaic_0001>

<llo_original>
// kernel: nsf_ar_forward.1
$region0: #{nsf_ar_forward.1}
  #allocation0 [shape = 'u32[]', space=smem, size = 0x4, offset = 0x4, fixed_abs, tag = 'smem constant byte address 0x4 - core index']
  #allocation1 [shape = 'u32[72,128]{1,0:T(1,128)}', space=vmem, size = 0x9000, scoped, tag = 'internal scratch']
  %s0 = inlined_call_operand.vmem [shape: f32[8,4], index: 0, kind: input, shape index: {}]
  %s1 = inlined_call_operand.vmem [shape: f32[8,8], index: 1, kind: input, shape index: {}]
  %s2 = inlined_call_operand.vmem [shape: f32[8,96], index: 2, kind: input, shape index: {}]
  %s3 = inlined_call_operand.vmem [shape: f32[1,96], index: 3, kind: input, shape index: {}]
  %s4 = inlined_call_operand.hbm [shape: f32[96,96], index: 4, kind: input, shape index: {}]
  %s5 = inlined_call_operand.vmem [shape: f32[1,96], index: 5, kind: input, shape index: {}]
  %s6 = inlined_call_operand.hbm [shape: f32[96,384], index: 6, kind: input, shape index: {}]
  %s7 = inlined_call_operand.vmem [shape: f32[1,384], index: 7, kind: input, shape index: {}]
  %s8 = inlined_call_operand.hbm [shape: f32[128,128], index: 8, kind: input, shape index: {}]
  %s9 = inlined_call_operand.hbm [shape: f32[128,128], index: 9, kind: input, shape index: {}]
  %s10 = inlined_call_operand.hbm [shape: f32[128,4], index: 10, kind: input, shape index: {}]
  %s11 = inlined_call_operand.vmem [shape: f32[4,128], index: 11, kind: input, shape index: {}]
  %s12 = inlined_call_operand.vmem [shape: f32[8,4], index: 12, kind: output, shape index: {0}]
  %s13 = inlined_call_operand.vmem [shape: f32[8,1], index: 13, kind: output, shape index: {1}]
  %14 = xla_tuple %s12, %s13
  %s15 = sld [smem:[#allocation0]]
  $region86: #{nsf_ar_forward.1} parent=0
    _
  %s17 = ssub.s32 1, %s15
  %s18 = scalar_select 0, %s17, %s15
  $region1: #{nsf_ar_forward.1} parent=0
    #allocation2 [shape = 'u8[49152]{0}', space=vmem, size = 0xc000, scoped, tag = 'input window, operand 4, single buffered']
    #allocation3 [shape = 's32[1]{0}', space=sflag, size = 0x4, scoped, tag = 'scoped memory for nsf_ar_forward.1']
    #allocation4 [shape = 'u8[147456]{0}', space=vmem, size = 0x24000, scoped, tag = 'input window, operand 6, single buffered']
    #allocation5 [shape = 's32[1]{0}', space=sflag, size = 0x4, scoped, tag = 'scoped memory for nsf_ar_forward.1']
    #allocation6 [shape = 'u8[65536]{0}', space=vmem, size = 0x10000, scoped, tag = 'input window, operand 8, single buffered']
    #allocation7 [shape = 'u8[65536]{0}', space=vmem, size = 0x10000, scoped, tag = 'input window, operand 9, single buffered']
    #allocation8 [shape = 's32[1]{0}', space=sflag, size = 0x4, scoped, tag = 'scoped memory for nsf_ar_forward.1']
    #allocation9 [shape = 'u8[65536]{0}', space=vmem, size = 0x10000, scoped, tag = 'input window, operand 10, single buffered']
    %19 = vsyncpa [#allocation3], 0
    %20 = vsyncpa [#allocation5], 0
    %21 = vsyncpa [#allocation8], 0
    // Predicated region
    $region2: #{nsf_ar_forward.1} parent=1 // pred_check
      _
    $region3: #{nsf_ar_forward.1} parent=1 // pred_check_branch
      %23 = sbr.rel (0) target = $region5
    $region4: #{nsf_ar_forward.1} parent=1 // pred_region
      _
    $region5: #{nsf_ar_forward.1} parent=1 // pred_fallthru
      _
    // Predicated region
    $region6: #{nsf_ar_forward.1} parent=1 // pred_check
      _
    $region7: #{nsf_ar_forward.1} parent=1 // pred_check_branch
      %25 = sbr.rel (0) target = $region9
    $region8: #{nsf_ar_forward.1} parent=1 // pred_region
      _
    $region9: #{nsf_ar_forward.1} parent=1 // pred_fallthru
      _
    // Predicated region
    $region10: #{nsf_ar_forward.1} parent=1 // pred_check
      _
    $region11: #{nsf_ar_forward.1} parent=1 // pred_check_branch
      %27 = sbr.rel (0) target = $region13
    $region12: #{nsf_ar_forward.1} parent=1 // pred_region
      _
    $region13: #{nsf_ar_forward.1} parent=1 // pred_fallthru
      _
    // Predicated region
    $region14: #{nsf_ar_forward.1} parent=1 // pred_check
      _
    $region15: #{nsf_ar_forward.1} parent=1 // pred_check_branch
      %29 = sbr.rel (0) target = $region17
    $region16: #{nsf_ar_forward.1} parent=1 // pred_region
      _
    $region17: #{nsf_ar_forward.1} parent=1 // pred_fallthru
      _
    // Predicated region
    $region18: #{nsf_ar_forward.1} parent=1 // pred_check
      _
    $region19: #{nsf_ar_forward.1} parent=1 // pred_check_branch
      %31 = sbr.rel (0) target = $region21
    $region20: #{nsf_ar_forward.1} parent=1 // pred_region
      %33 = vsyncadd [#allocation3], 0
      %s34 = sshll.u32 %s4, 4
      %s35 = int_to_ptr.hbm [resolvable:$true] %s34
      %s36 = sshll.u32 [#allocation2], 4
      %s37 = int_to_ptr.vmem [resolvable:$true] %s36
      %42 = dma.hbm_to_vmem [thread:$0]  %s35, 1536, %s37, [#allocation3], 128, 128, 8
    $region21: #{nsf_ar_forward.1} parent=1 // pred_fallthru
      _
    // Predicated region
    $region22: #{nsf_ar_forward.1} parent=1 // pred_check
      _
    $region23: #{nsf_ar_forward.1} parent=1 // pred_check_branch
      %44 = sbr.rel (0) target = $region25
    $region24: #{nsf_ar_forward.1} parent=1 // pred_region
      _
    $region25: #{nsf_ar_forward.1} parent=1 // pred_fallthru
      _
    // Predicated region
    $region26: #{nsf_ar_forward.1} parent=1 // pred_check
      _
    $region27: #{nsf_ar_forward.1} parent=1 // pred_check_branch
      %46 = sbr.rel (0) target = $region29
    $region28: #{nsf_ar_forward.1} parent=1 // pred_region
      %48 = vsyncadd [#allocation5], 0
      %s49 = sshll.u32 %s6, 4
      %s50 = int_to_ptr.hbm [resolvable:$true] %s49
      %s51 = sshll.u32 [#allocation4], 4
      %s52 = int_to_ptr.vmem [resolvable:$true] %s51
      %57 = dma.hbm_to_vmem [thread:$0]  %s50, 4608, %s52, [#allocation5], 384, 384, 24
    $region29: #{nsf_ar_forward.1} parent=1 // pred_fallthru
      _
    // Predicated region
    $region30: #{nsf_ar_forward.1} parent=1 // pred_check
      _
    $region31: #{nsf_ar_forward.1} parent=1 // pred_check_branch
      %59 = sbr.rel (0) target = $region33
    $region32: #{nsf_ar_forward.1} parent=1 // pred_region
      _
    $region33: #{nsf_ar_forward.1} parent=1 // pred_fallthru
      _
    // Predicated region
    $region34: #{nsf_ar_forward.1} parent=1 // pred_check
      _
    $region35: #{nsf_ar_forward.1} parent=1 // pred_check_branch
      %61 = sbr.rel (0) target = $region37
    $region36: #{nsf_ar_forward.1} parent=1 // pred_region
      %63 = vsyncadd [#allocation5], 0
      %s64 = sshll.u32 %s8, 4
      %s65 = int_to_ptr.hbm [resolvable:$true] %s64
      %s66 = sshll.u32 [#allocation6], 4
      %s67 = int_to_ptr.vmem [resolvable:$true] %s66
      %72 = dma.hbm_to_vmem [thread:$0]  %s65, 2048, %s67, [#allocation5], 128, 128, 8
    $region37: #{nsf_ar_forward.1} parent=1 // pred_fallthru
      _
    // Predicated region
    $region38: #{nsf_ar_forward.1} parent=1 // pred_check
      _
    $region39: #{nsf_ar_forward.1} parent=1 // pred_check_branch
      %74 = sbr.rel (0) target = $region41
    $region40: #{nsf_ar_forward.1} parent=1 // pred_region
      %76 = vsyncadd [#allocation8], 0
      %s77 = sshll.u32 %s9, 4
      %s78 = int_to_ptr.hbm [resolvable:$true] %s77
      %s79 = sshll.u32 [#allocation7], 4
      %s80 = int_to_ptr.vmem [resolvable:$true] %s79
      %85 = dma.hbm_to_vmem [thread:$0]  %s78, 2048, %s80, [#allocation8], 128, 128, 8
    $region41: #{nsf_ar_forward.1} parent=1 // pred_fallthru
      _
    // Predicated region
    $region42: #{nsf_ar_forward.1} parent=1 // pred_check
      _
    $region43: #{nsf_ar_forward.1} parent=1 // pred_check_branch
      %87 = sbr.rel (0) target = $region45
    $region44: #{nsf_ar_forward.1} parent=1 // pred_region
      %89 = vsyncadd [#allocation8], 0
      %s90 = sshll.u32 %s10, 4
      %s91 = int_to_ptr.hbm [resolvable:$true] %s90
      %s92 = sshll.u32 [#allocation9], 4
      %s93 = int_to_ptr.vmem [resolvable:$true] %s92
      %98 = dma.hbm_to_vmem [thread:$0]  %s91, 2048, %s93, [#allocation8], 128, 128, 8
    $region45: #{nsf_ar_forward.1} parent=1 // pred_fallthru
      _
    // Predicated region
    $region46: #{nsf_ar_forward.1} parent=1 // pred_check
      _
    $region47: #{nsf_ar_forward.1} parent=1 // pred_check_branch
      %100 = sbr.rel (0) target = $region49
    $region48: #{nsf_ar_forward.1} parent=1 // pred_region
      _
    $region49: #{nsf_ar_forward.1} parent=1 // pred_fallthru
      _
    // Predicated region
    $region50: #{nsf_ar_forward.1} parent=1 // pred_check
      _
    $region51: #{nsf_ar_forward.1} parent=1 // pred_check_branch
      %102 = sbr.rel (0) target = $region53
    $region52: #{nsf_ar_forward.1} parent=1 // pred_region
      %104 = dma.done [#allocation3], 1536
    $region53: #{nsf_ar_forward.1} parent=1 // pred_fallthru
      _
    // Predicated region
    $region54: #{nsf_ar_forward.1} parent=1 // pred_check
      _
    $region55: #{nsf_ar_forward.1} parent=1 // pred_check_branch
      %106 = sbr.rel (0) target = $region57
    $region56: #{nsf_ar_forward.1} parent=1 // pred_region
      %108 = dma.done [#allocation5], 4608
    $region57: #{nsf_ar_forward.1} parent=1 // pred_fallthru
      _
    // Predicated region
    $region58: #{nsf_ar_forward.1} parent=1 // pred_check
      _
    $region59: #{nsf_ar_forward.1} parent=1 // pred_check_branch
      %110 = sbr.rel (0) target = $region61
    $region60: #{nsf_ar_forward.1} parent=1 // pred_region
      %112 = dma.done [#allocation5], 2048
    $region61: #{nsf_ar_forward.1} parent=1 // pred_fallthru
      _
    // Predicated region
    $region62: #{nsf_ar_forward.1} parent=1 // pred_check
      _
    $region63: #{nsf_ar_forward.1} parent=1 // pred_check_branch
      %114 = sbr.rel (0) target = $region65
    $region64: #{nsf_ar_forward.1} parent=1 // pred_region
      %116 = dma.done [#allocation8], 2048
    $region65: #{nsf_ar_forward.1} parent=1 // pred_fallthru
      _
    // Predicated region
    $region66: #{nsf_ar_forward.1} parent=1 // pred_check
      _
    $region67: #{nsf_ar_forward.1} parent=1 // pred_check_branch
      %118 = sbr.rel (0) target = $region69
    $region68: #{nsf_ar_forward.1} parent=1 // pred_region
      %120 = dma.done [#allocation8], 2048
    $region69: #{nsf_ar_forward.1} parent=1 // pred_fallthru
      _
    %v121 = vld [vmem:[%s0] sm:$0xff]
    %v122 = vld [vmem:[%s1] sm:$0xff]
    %v123 = vld [vmem:[%s2] sm:$0xff]
    %v124 = vld [vmem:[%s3] sm:$0x1]
    %v126 = vperm.slane %v124, 0
    %vm128 = vcmask 64512
    %v130 = vsel %vm128, %v122, 0
    %132 = vmatpush.msra.mxu0 0.0
    %133 = vmatpush.msra.mxu0 0.0
    %134 = vmatpush.msra.mxu0 0.0
    %135 = vmatpush.msra.mxu0 0.0
    %136 = vmatpush.msra.mxu0 0.0
    %137 = vmatpush.msra.mxu0 0.0
    %138 = vmatpush.msra.mxu0 0.0
    %139 = vmatpush.msra.mxu0 0.0
    %140 = vmatpush.msra.mxu0 0.0
    %141 = vmatpush.msra.mxu0 0.0
    %142 = vmatpush.msra.mxu0 0.0
    %143 = vmatpush.msra.mxu0 0.0
    %144 = vmatpush.msra.mxu0 0.0
    %145 = vmatpush.msra.mxu0 0.0
    %146 = vmatpush.msra.mxu0 0.0
    %147 = vmatpush.msra.mxu0 %v123
    %148 = vmatmul.f32.gmra.mxu0 %v130
    %v149 = vpop.f32.mrf.mxu0
    %v150 = vadd.f32 %v126, %v149
    %151 = vdwg.mxu0
    %v152 = vtanh.pop %v150
    %v153 = vld [vmem:[#allocation2] sm:$0xff]
    %v154 = vld [vmem:[#allocation2 + $0x8] sm:$0xff]
    %v155 = vld [vmem:[#allocation2 + $0x10] sm:$0xff]
    %v156 = vld [vmem:[#allocation2 + $0x18] sm:$0xff]
    %v157 = vld [vmem:[#allocation2 + $0x20] sm:$0xff]
    %v158 = vld [vmem:[#allocation2 + $0x28] sm:$0xff]
    %v159 = vld [vmem:[#allocation2 + $0x30] sm:$0xff]
    %v160 = vld [vmem:[#allocation2 + $0x38] sm:$0xff]
    %v161 = vld [vmem:[#allocation2 + $0x40] sm:$0xff]
    %v162 = vld [vmem:[#allocation2 + $0x48] sm:$0xff]
    %v163 = vld [vmem:[#allocation2 + $0x50] sm:$0xff]
    %v164 = vld [vmem:[#allocation2 + $0x58] sm:$0xff]
    %v165 = vld [vmem:[%s5] sm:$0x1]
    %v167 = vperm.slane %v165, 0
    %vm169 = vcmask 785408
    %v171 = vsel %vm169, %v152, 0
    %173 = vmatpush.msra.mxu0 0.0
    %174 = vmatpush.msra.mxu0 0.0
    %175 = vmatpush.msra.mxu0 0.0
    %176 = vmatpush.msra.mxu0 0.0
    %177 = vmatpush.msra.mxu0 %v164
    %178 = vmatpush.msra.mxu0 %v163
    %179 = vmatpush.msra.mxu0 %v162
    %180 = vmatpush.msra.mxu0 %v161
    %181 = vmatpush.msra.mxu0 %v160
    %182 = vmatpush.msra.mxu0 %v159
    %183 = vmatpush.msra.mxu0 %v158
    %184 = vmatpush.msra.mxu0 %v157
    %185 = vmatpush.msra.mxu0 %v156
    %186 = vmatpush.msra.mxu0 %v155
    %187 = vmatpush.msra.mxu0 %v154
    %188 = vmatpush.msra.mxu0 %v153
    %189 = vmatmul.f32.gmra.mxu0 %v171
    %v190 = vpop.f32.mrf.mxu0
    %v191 = vadd.f32 %v167, %v190
    %192 = vdwg.mxu0
    %v193 = vtanh.pop %v191
    %v194 = vld [vmem:[#allocation4] sm:$0xff]
    %v195 = vld [vmem:[#allocation4 + $0x8] sm:$0xff]
    %v196 = vld [vmem:[#allocation4 + $0x10] sm:$0xff]
    %v197 = vld [vmem:[#allocation4 + $0x18] sm:$0xff]
    %v198 = vld [vmem:[#allocation4 + $0x20] sm:$0xff]
    %v199 = vld [vmem:[#allocation4 + $0x28] sm:$0xff]
    %v200 = vld [vmem:[#allocation4 + $0x30] sm:$0xff]
    %v201 = vld [vmem:[#allocation4 + $0x38] sm:$0xff]
    %v202 = vld [vmem:[#allocation4 + $0x40] sm:$0xff]
    %v203 = vld [vmem:[#allocation4 + $0x48] sm:$0xff]
    %v204 = vld [vmem:[#allocation4 + $0x50] sm:$0xff]
    %v205 = vld [vmem:[#allocation4 + $0x58] sm:$0xff]
    %v206 = vld [vmem:[#allocation4 + $0x60] sm:$0xff]
    %v207 = vld [vmem:[#allocation4 + $0x68] sm:$0xff]
    %v208 = vld [vmem:[#allocation4 + $0x70] sm:$0xff]
    %v209 = vld [vmem:[#allocation4 + $0x78] sm:$0xff]
    %v210 = vld [vmem:[#allocation4 + $0x80] sm:$0xff]
    %v211 = vld [vmem:[#allocation4 + $0x88] sm:$0xff]
    %v212 = vld [vmem:[#allocation4 + $0x90] sm:$0xff]
    %v213 = vld [vmem:[#allocation4 + $0x98] sm:$0xff]
    %v214 = vld [vmem:[#allocation4 + $0xa0] sm:$0xff]
    %v215 = vld [vmem:[#allocation4 + $0xa8] sm:$0xff]
    %v216 = vld [vmem:[#allocation4 + $0xb0] sm:$0xff]
    %v217 = vld [vmem:[#allocation4 + $0xb8] sm:$0xff]
    %v218 = vld [vmem:[#allocation4 + $0xc0] sm:$0xff]
    %v219 = vld [vmem:[#allocation4 + $0xc8] sm:$0xff]
    %v220 = vld [vmem:[#allocation4 + $0xd0] sm:$0xff]
    %v221 = vld [vmem:[#allocation4 + $0xd8] sm:$0xff]
    %v222 = vld [vmem:[#allocation4 + $0xe0] sm:$0xff]
    %v223 = vld [vmem:[#allocation4 + $0xe8] sm:$0xff]
    %v224 = vld [vmem:[#allocation4 + $0xf0] sm:$0xff]
    %v225 = vld [vmem:[#allocation4 + $0xf8] sm:$0xff]
    %v226 = vld [vmem:[#allocation4 + $0x100] sm:$0xff]
    %v227 = vld [vmem:[#allocation4 + $0x108] sm:$0xff]
    %v228 = vld [vmem:[#allocation4 + $0x110] sm:$0xff]
    %v229 = vld [vmem:[#allocation4 + $0x118] sm:$0xff]
    %v230 = vld [vmem:[%s7] sm:$0x7]
    %v232 = vperm.slane %v230, 0
    %v233 = vperm.slane %v230, 1
    %v234 = vperm.slane %v230, 2
    %v239 = vsel %vm169, %v193, 0
    %241 = vmatpush.msra.mxu0 0.0
    %242 = vmatpush.msra.mxu0 0.0
    %243 = vmatpush.msra.mxu0 0.0
    %244 = vmatpush.msra.mxu0 0.0
    %245 = vmatpush.msra.mxu0 %v227
    %246 = vmatpush.msra.mxu0 %v224
    %247 = vmatpush.msra.mxu0 %v221
    %248 = vmatpush.msra.mxu0 %v218
    %249 = vmatpush.msra.mxu0 %v215
    %250 = vmatpush.msra.mxu0 %v212
    %251 = vmatpush.msra.mxu0 %v209
    %252 = vmatpush.msra.mxu0 %v206
    %253 = vmatpush.msra.mxu0 %v203
    %254 = vmatpush.msra.mxu0 %v200
    %255 = vmatpush.msra.mxu0 %v197
    %256 = vmatpush.msra.mxu0 %v194
    %257 = vmatmul.f32.gmra.mxu0 %v239
    %v258 = vpop.f32.mrf.mxu0
    %v259 = vadd.f32 %v232, %v258
    %260 = vdwg.mxu0
    %261 = vmatpush.msra.mxu0 0.0
    %262 = vmatpush.msra.mxu0 0.0
    %263 = vmatpush.msra.mxu0 0.0
    %264 = vmatpush.msra.mxu0 0.0
    %265 = vmatpush.msra.mxu0 %v228
    %266 = vmatpush.msra.mxu0 %v225
    %267 = vmatpush.msra.mxu0 %v222
    %268 = vmatpush.msra.mxu0 %v219
    %269 = vmatpush.msra.mxu0 %v216
    %270 = vmatpush.msra.mxu0 %v213
    %271 = vmatpush.msra.mxu0 %v210
    %272 = vmatpush.msra.mxu0 %v207
    %273 = vmatpush.msra.mxu0 %v204
    %274 = vmatpush.msra.mxu0 %v201
    %275 = vmatpush.msra.mxu0 %v198
    %276 = vmatpush.msra.mxu0 %v195
    %277 = vmatmul.f32.gmra.mxu0 %v239
    %v278 = vpop.f32.mrf.mxu0
    %v279 = vadd.f32 %v233, %v278
    %280 = vdwg.mxu0
    %281 = vmatpush.msra.mxu0 0.0
    %282 = vmatpush.msra.mxu0 0.0
    %283 = vmatpush.msra.mxu0 0.0
    %284 = vmatpush.msra.mxu0 0.0
    %285 = vmatpush.msra.mxu0 %v229
    %286 = vmatpush.msra.mxu0 %v226
    %287 = vmatpush.msra.mxu0 %v223
    %288 = vmatpush.msra.mxu0 %v220
    %289 = vmatpush.msra.mxu0 %v217
    %290 = vmatpush.msra.mxu0 %v214
    %291 = vmatpush.msra.mxu0 %v211
    %292 = vmatpush.msra.mxu0 %v208
    %293 = vmatpush.msra.mxu0 %v205
    %294 = vmatpush.msra.mxu0 %v202
    %295 = vmatpush.msra.mxu0 %v199
    %296 = vmatpush.msra.mxu0 %v196
    %297 = vmatmul.f32.gmra.mxu0 %v239
    %v298 = vpop.f32.mrf.mxu0
    %v299 = vadd.f32 %v234, %v298
    %300 = vdwg.mxu0
    %v301 = vld [vmem:[#allocation6] sm:$0xff]
    %v302 = vld [vmem:[#allocation6 + $0x8] sm:$0xff]
    %v303 = vld [vmem:[#allocation6 + $0x10] sm:$0xff]
    %v304 = vld [vmem:[#allocation6 + $0x18] sm:$0xff]
    %v305 = vld [vmem:[#allocation6 + $0x20] sm:$0xff]
    %v306 = vld [vmem:[#allocation6 + $0x28] sm:$0xff]
    %v307 = vld [vmem:[#allocation6 + $0x30] sm:$0xff]
    %v308 = vld [vmem:[#allocation6 + $0x38] sm:$0xff]
    %v309 = vld [vmem:[#allocation6 + $0x40] sm:$0xff]
    %v310 = vld [vmem:[#allocation6 + $0x48] sm:$0xff]
    %v311 = vld [vmem:[#allocation6 + $0x50] sm:$0xff]
    %v312 = vld [vmem:[#allocation6 + $0x58] sm:$0xff]
    %v313 = vld [vmem:[#allocation6 + $0x60] sm:$0xff]
    %v314 = vld [vmem:[#allocation6 + $0x68] sm:$0xff]
    %v315 = vld [vmem:[#allocation6 + $0x70] sm:$0xff]
    %v316 = vld [vmem:[#allocation6 + $0x78] sm:$0xff]
    %v317 = vld [vmem:[#allocation7] sm:$0xff]
    %v318 = vld [vmem:[#allocation7 + $0x8] sm:$0xff]
    %v319 = vld [vmem:[#allocation7 + $0x10] sm:$0xff]
    %v320 = vld [vmem:[#allocation7 + $0x18] sm:$0xff]
    %v321 = vld [vmem:[#allocation7 + $0x20] sm:$0xff]
    %v322 = vld [vmem:[#allocation7 + $0x28] sm:$0xff]
    %v323 = vld [vmem:[#allocation7 + $0x30] sm:$0xff]
    %v324 = vld [vmem:[#allocation7 + $0x38] sm:$0xff]
    %v325 = vld [vmem:[#allocation7 + $0x40] sm:$0xff]
    %v326 = vld [vmem:[#allocation7 + $0x48] sm:$0xff]
    %v327 = vld [vmem:[#allocation7 + $0x50] sm:$0xff]
    %v328 = vld [vmem:[#allocation7 + $0x58] sm:$0xff]
    %v329 = vld [vmem:[#allocation7 + $0x60] sm:$0xff]
    %v330 = vld [vmem:[#allocation7 + $0x68] sm:$0xff]
    %v331 = vld [vmem:[#allocation7 + $0x70] sm:$0xff]
    %v332 = vld [vmem:[#allocation7 + $0x78] sm:$0xff]
    %v333 = vld [vmem:[#allocation9] sm:$0xff]
    %v334 = vld [vmem:[#allocation9 + $0x8] sm:$0xff]
    %v335 = vld [vmem:[#allocation9 + $0x10] sm:$0xff]
    %v336 = vld [vmem:[#allocation9 + $0x18] sm:$0xff]
    %v337 = vld [vmem:[#allocation9 + $0x20] sm:$0xff]
    %v338 = vld [vmem:[#allocation9 + $0x28] sm:$0xff]
    %v339 = vld [vmem:[#allocation9 + $0x30] sm:$0xff]
    %v340 = vld [vmem:[#allocation9 + $0x38] sm:$0xff]
    %v341 = vld [vmem:[#allocation9 + $0x40] sm:$0xff]
    %v342 = vld [vmem:[#allocation9 + $0x48] sm:$0xff]
    %v343 = vld [vmem:[#allocation9 + $0x50] sm:$0xff]
    %v344 = vld [vmem:[#allocation9 + $0x58] sm:$0xff]
    %v345 = vld [vmem:[#allocation9 + $0x60] sm:$0xff]
    %v346 = vld [vmem:[#allocation9 + $0x68] sm:$0xff]
    %v347 = vld [vmem:[#allocation9 + $0x70] sm:$0xff]
    %v348 = vld [vmem:[#allocation9 + $0x78] sm:$0xff]
    %v349 = vld [vmem:[%s11] sm:$0xf]
    %v350 = vlaneseq
    %v351 = vand.u32 %v350, 127
    %vm352 = vcmp.lt.s32.totalorder %v351, 0
    %v353 = vsub.s32 0, %v351
    %v354 = vsel %vm352, %v353, %v351
    %v355 = vshrl.u32 %v354, 5
    %v356 = vand.u32 %v354, 31
    %v357 = vsub.s32 0, %v356
    %v358 = vsel %vm352, %v357, %v356
    %vm359 = vcmp.ne.s32.totalorder %v358, 0
    %vm360 = vcmp.lt.s32.totalorder %v358, 0
    %vm361 = vmand %vm360, %vm359
    %v362 = vadd.s32 %v358, 32
    %v363 = vsel %vm361, %v362, %v358
    %vm364 = vcmp.eq.s32.totalorder %v363, 0
    %vm365 = vcmp.eq.s32.totalorder %v363, 31
    %366 = vmax.xlane.f32.xlu0 %v259
    %v367 = vpop.xlane.xlu0 %366
    %v368 = vsub.f32 %v259, %v367
    %v369 = vmul.f32 %v368, 1.442695
    %v370 = vpow.pop %v369
    %371 = vmatpush.msra.mxu0 %v316
    %372 = vmatpush.msra.mxu0 %v315
    %373 = vmatpush.msra.mxu0 %v314
    %374 = vmatpush.msra.mxu0 %v313
    %375 = vmatpush.msra.mxu0 %v312
    %376 = vmatpush.msra.mxu0 %v311
    %377 = vmatpush.msra.mxu0 %v310
    %378 = vmatpush.msra.mxu0 %v309
    %379 = vmatpush.msra.mxu0 %v308
    %380 = vmatpush.msra.mxu0 %v307
    %381 = vmatpush.msra.mxu0 %v306
    %382 = vmatpush.msra.mxu0 %v305
    %383 = vmatpush.msra.mxu0 %v304
    %384 = vmatpush.msra.mxu0 %v303
    %385 = vmatpush.msra.mxu0 %v302
    %386 = vmatpush.msra.mxu0 %v301
    %387 = vmatmul.f32.gmra.mxu0 %v370
    %v388 = vpop.f32.mrf.mxu0
    %v389 = vadd.f32 0.0, %v388
    %390 = vdwg.mxu0
    %v391 = vrcp.pop %v389
    %v392 = vmul.f32 %v370, %v391
    %v393 = vmul.f32 %v392, 6.0
    %v394 = vmul.f32 %v393, 1.442695
    %v395 = vpow.pop %v394
    %396 = vmatpush.msra.mxu0 %v316
    %397 = vmatpush.msra.mxu0 %v315
    %398 = vmatpush.msra.mxu0 %v314
    %399 = vmatpush.msra.mxu0 %v313
    %400 = vmatpush.msra.mxu0 %v312
    %401 = vmatpush.msra.mxu0 %v311
    %402 = vmatpush.msra.mxu0 %v310
    %403 = vmatpush.msra.mxu0 %v309
    %404 = vmatpush.msra.mxu0 %v308
    %405 = vmatpush.msra.mxu0 %v307
    %406 = vmatpush.msra.mxu0 %v306
    %407 = vmatpush.msra.mxu0 %v305
    %408 = vmatpush.msra.mxu0 %v304
    %409 = vmatpush.msra.mxu0 %v303
    %410 = vmatpush.msra.mxu0 %v302
    %411 = vmatpush.msra.mxu0 %v301
    %412 = vmatmul.f32.gmra.mxu0 %v395
    %v413 = vpop.f32.mrf.mxu0
    %v414 = vadd.f32 0.0, %v413
    %415 = vdwg.mxu0
    %v416 = vrcp.pop %v414
    %v417 = vmul.f32 %v395, %v416
    %v418 = vmul.f32 %v417, 0.968
    %v419 = vadd.f32 %v418, 0.001
    %420 = vmatpush.msra.mxu0 %v332
    %421 = vmatpush.msra.mxu0 %v331
    %422 = vmatpush.msra.mxu0 %v330
    %423 = vmatpush.msra.mxu0 %v329
    %424 = vmatpush.msra.mxu0 %v328
    %425 = vmatpush.msra.mxu0 %v327
    %426 = vmatpush.msra.mxu0 %v326
    %427 = vmatpush.msra.mxu0 %v325
    %428 = vmatpush.msra.mxu0 %v324
    %429 = vmatpush.msra.mxu0 %v323
    %430 = vmatpush.msra.mxu0 %v322
    %431 = vmatpush.msra.mxu0 %v321
    %432 = vmatpush.msra.mxu0 %v320
    %433 = vmatpush.msra.mxu0 %v319
    %434 = vmatpush.msra.mxu0 %v318
    %435 = vmatpush.msra.mxu0 %v317
    %436 = vmatmul.f32.gmra.mxu0 %v419
    %v437 = vpop.f32.mrf.mxu0
    %v438 = vadd.f32 0.0, %v437
    %439 = vdwg.mxu0
    %v440 = vmul.f32 %v438, 6.0
    %v441 = vadd.f32 %v440, -3.0
    %v442 = vsel %vm365, 1, 0
    %vm443 = vcmp.eq.s32.totalorder %v442, 1
    %v444 = vsel %vm443, 3.0, %v441
    %v445 = vmul.f32 %v419, 6.0
    %v446 = vsub.f32 %v441, %v445
    %v447 = vsel %vm364, 1, 0
    %vm448 = vcmp.eq.s32.totalorder %v447, 1
    %v449 = vsel %vm448, -3.0, %v446
    %v450 = vsub.f32 %v444, %v449
    %451 = vmax.xlane.f32.xlu0 %v279
    %v452 = vpop.xlane.xlu0 %451
    %v453 = vsub.f32 %v279, %v452
    %v454 = vmul.f32 %v453, 1.442695
    %v455 = vpow.pop %v454
    %456 = vmatpush.msra.mxu0 %v316
    %457 = vmatpush.msra.mxu0 %v315
    %458 = vmatpush.msra.mxu0 %v314
    %459 = vmatpush.msra.mxu0 %v313
    %460 = vmatpush.msra.mxu0 %v312
    %461 = vmatpush.msra.mxu0 %v311
    %462 = vmatpush.msra.mxu0 %v310
    %463 = vmatpush.msra.mxu0 %v309
    %464 = vmatpush.msra.mxu0 %v308
    %465 = vmatpush.msra.mxu0 %v307
    %466 = vmatpush.msra.mxu0 %v306
    %467 = vmatpush.msra.mxu0 %v305
    %468 = vmatpush.msra.mxu0 %v304
    %469 = vmatpush.msra.mxu0 %v303
    %470 = vmatpush.msra.mxu0 %v302
    %471 = vmatpush.msra.mxu0 %v301
    %472 = vmatmul.f32.gmra.mxu0 %v455
    %v473 = vpop.f32.mrf.mxu0
    %v474 = vadd.f32 0.0, %v473
    %475 = vdwg.mxu0
    %v476 = vrcp.pop %v474
    %v477 = vmul.f32 %v455, %v476
    %v478 = vmul.f32 %v477, 6.0
    %v479 = vmul.f32 %v478, 1.442695
    %v480 = vpow.pop %v479
    %481 = vmatpush.msra.mxu0 %v316
    %482 = vmatpush.msra.mxu0 %v315
    %483 = vmatpush.msra.mxu0 %v314
    %484 = vmatpush.msra.mxu0 %v313
    %485 = vmatpush.msra.mxu0 %v312
    %486 = vmatpush.msra.mxu0 %v311
    %487 = vmatpush.msra.mxu0 %v310
    %488 = vmatpush.msra.mxu0 %v309
    %489 = vmatpush.msra.mxu0 %v308
    %490 = vmatpush.msra.mxu0 %v307
    %491 = vmatpush.msra.mxu0 %v306
    %492 = vmatpush.msra.mxu0 %v305
    %493 = vmatpush.msra.mxu0 %v304
    %494 = vmatpush.msra.mxu0 %v303
    %495 = vmatpush.msra.mxu0 %v302
    %496 = vmatpush.msra.mxu0 %v301
    %497 = vmatmul.f32.gmra.mxu0 %v480
    %v498 = vpop.f32.mrf.mxu0
    %v499 = vadd.f32 0.0, %v498
    %500 = vdwg.mxu0
    %v501 = vrcp.pop %v499
    %v502 = vmul.f32 %v480, %v501
    %v503 = vmul.f32 %v502, 0.968
    %v504 = vadd.f32 %v503, 0.001
    %505 = vmatpush.msra.mxu0 %v332
    %506 = vmatpush.msra.mxu0 %v331
    %507 = vmatpush.msra.mxu0 %v330
    %508 = vmatpush.msra.mxu0 %v329
    %509 = vmatpush.msra.mxu0 %v328
    %510 = vmatpush.msra.mxu0 %v327
    %511 = vmatpush.msra.mxu0 %v326
    %512 = vmatpush.msra.mxu0 %v325
    %513 = vmatpush.msra.mxu0 %v324
    %514 = vmatpush.msra.mxu0 %v323
    %515 = vmatpush.msra.mxu0 %v322
    %516 = vmatpush.msra.mxu0 %v321
    %517 = vmatpush.msra.mxu0 %v320
    %518 = vmatpush.msra.mxu0 %v319
    %519 = vmatpush.msra.mxu0 %v318
    %520 = vmatpush.msra.mxu0 %v317
    %521 = vmatmul.f32.gmra.mxu0 %v504
    %v522 = vpop.f32.mrf.mxu0
    %v523 = vadd.f32 0.0, %v522
    %524 = vdwg.mxu0
    %v525 = vmul.f32 %v523, 6.0
    %v526 = vadd.f32 %v525, -3.0
    %v527 = vsel %vm443, 3.0, %v526
    %v528 = vmul.f32 %v504, 6.0
    %v529 = vsub.f32 %v526, %v528
    %v530 = vsel %vm448, -3.0, %v529
    %v531 = vsub.f32 %v527, %v530
    %v532 = vmax.f32 %v299, 0.0
    %v533 = vand.u32 2147483647, %v299
    %v534 = vsub.f32 0.0, %v533
    %v535 = vmul.f32 %v534, 1.442695
    %v536 = vpow.pop %v535
    %v537 = vadd.f32 %v536, 1.0
    %v538 = vlog2.pop %v537
    %v539 = vmul.f32 %v538, 0.6931472
    %v540 = vmul.f32 -0.5, %v536
    %v541 = vadd.f32 %v540, 1.0
    %v542 = vmul.f32 %v541, %v536
    %v543 = vand.u32 2147483647, %v536
    %vm544 = vcmp.lt.f32.partialorder %v543, 0.0004427343
    %v545 = vsel %vm544, %v542, %v539
    %v546 = vadd.f32 %v532, %v545
    %v547 = vmax.f32 %v546, 0.0
    %v548 = vand.u32 2147483647, %v546
    %v549 = vsub.f32 0.0, %v548
    %v550 = vmul.f32 %v549, 1.442695
    %v551 = vpow.pop %v550
    %v552 = vadd.f32 %v551, 1.0
    %v553 = vlog2.pop %v552
    %v554 = vmul.f32 %v553, 0.6931472
    %v555 = vmul.f32 -0.5, %v551
    %v556 = vadd.f32 %v555, 1.0
    %v557 = vmul.f32 %v556, %v551
    %v558 = vand.u32 2147483647, %v551
    %vm559 = vcmp.lt.f32.partialorder %v558, 0.0004427343
    %v560 = vsel %vm559, %v557, %v554
    %v561 = vadd.f32 %v547, %v560
    %v562 = vadd.f32 %v561, 0.001
    %v563 = vsel %vm443, 1.0, %v562
    %564 = vrot.lane.b32.xlu0 %v562, 1
    %v565 = vpop.permute.xlu0 %564
    %v566 = vsel %vm448, 1.0, %v565
    %v567 = vmax.f32 %v121, -3.0
    %v568 = vmin.f32 %v567, 3.0
    %vm569 = vcmask 31744
    %v571 = vsel %vm569, %v568, 0
    %vm573 = vcmask 1043456
    %v575 = vsel %vm573, %v349, 0
    %577 = vmatpush.msra.mxu0 0.0
    %578 = vmatpush.msra.mxu0 0.0
    %579 = vmatpush.msra.mxu0 0.0
    %580 = vmatpush.msra.mxu0 0.0
    %581 = vmatpush.msra.mxu0 0.0
    %582 = vmatpush.msra.mxu0 0.0
    %583 = vmatpush.msra.mxu0 0.0
    %584 = vmatpush.msra.mxu0 0.0
    %585 = vmatpush.msra.mxu0 0.0
    %586 = vmatpush.msra.mxu0 0.0
    %587 = vmatpush.msra.mxu0 0.0
    %588 = vmatpush.msra.mxu0 0.0
    %589 = vmatpush.msra.mxu0 0.0
    %590 = vmatpush.msra.mxu0 0.0
    %591 = vmatpush.msra.mxu0 0.0
    %592 = vmatpush.msra.mxu0 %v575
    %593 = vmatmul.f32.gmra.mxu0 %v571
    %v594 = vpop.f32.mrf.mxu0
    %v595 = vadd.f32 0.0, %v594
    %596 = vdwg.mxu0
    %v597 = vsel %vm443, 3.000001, %v441
    %vm598 = vcmp.ge.f32.partialorder %v595, %v597
    %v599 = vsel %vm598, 1, 0
    %v600 = vcvt.s32.f32 %v599
    %601 = vmatpush.msra.mxu0 %v316
    %602 = vmatpush.msra.mxu0 %v315
    %603 = vmatpush.msra.mxu0 %v314
    %604 = vmatpush.msra.mxu0 %v313
    %605 = vmatpush.msra.mxu0 %v312
    %606 = vmatpush.msra.mxu0 %v311
    %607 = vmatpush.msra.mxu0 %v310
    %608 = vmatpush.msra.mxu0 %v309
    %609 = vmatpush.msra.mxu0 %v308
    %610 = vmatpush.msra.mxu0 %v307
    %611 = vmatpush.msra.mxu0 %v306
    %612 = vmatpush.msra.mxu0 %v305
    %613 = vmatpush.msra.mxu0 %v304
    %614 = vmatpush.msra.mxu0 %v303
    %615 = vmatpush.msra.mxu0 %v302
    %616 = vmatpush.msra.mxu0 %v301
    %617 = vmatmul.f32.gmra.mxu0 %v600
    %v618 = vpop.f32.mrf.mxu0
    %v619 = vadd.f32 0.0, %v618
    %620 = vdwg.mxu0
    %v621 = vcvt.f32.s32.to.zero.pseudo %v619
    %vm622 = vcmp.gt.s32.totalorder %v621, 0
    %v623 = vsel %vm622, %v621, 0
    %vm624 = vcmp.lt.s32.totalorder %v623, 31
    %v625 = vsel %vm624, %v623, 31
    %vm626 = vcmp.eq.s32.totalorder %v363, %v625
    %v627 = vsel %vm626, 1, 0
    %v628 = vcvt.s32.f32 %v627
    %v629 = vrcp.pop %v450
    %v630 = vmul.f32 %v450, %v629
    %v631 = vsub.f32 1.0, %v630
    %v632 = vmul.f32 %v629, %v631
    %v633 = vadd.f32 %v629, %v632
    %vm634 = vweird.f32 %v450
    %vm635 = vweird.f32 %v629
    %vm636 = vmor %vm634, %vm635
    %v637 = vsel %vm636, %v629, %v633
    %v638 = vand.u32 2147483647, %v450
    %vm639 = vcmp.eq.f32.partialorder %v638, 8.507059e+37
    %v640 = vand.u32 %v450, 2147483648
    %v641 = vor.u32 1.1754944e-38, %v640
    %v642 = vsel %vm639, %v641, %v637
    %v643 = vmul.f32 1.0, %v642
    %v644 = vsub.f32 %v595, %v449
    %v645 = vmul.f32 %v644, %v643
    %v646 = vmax.f32 %v645, 0.0
    %v647 = vmin.f32 %v646, 1.0
    %v648 = vsub.f32 1.0, %v647
    %v649 = vmul.f32 %v647, %v648
    %v650 = vmul.f32 %v531, %v643
    %v651 = vmul.f32 %v650, %v647
    %v652 = vmul.f32 %v651, %v647
    %v653 = vmul.f32 %v566, %v649
    %v654 = vadd.f32 %v652, %v653
    %v655 = vmul.f32 %v531, %v654
    %v656 = vadd.f32 %v566, %v563
    %v657 = vmul.f32 %v650, 2.0
    %v658 = vsub.f32 %v656, %v657
    %v659 = vmul.f32 %v658, %v649
    %v660 = vadd.f32 %v650, %v659
    %v661 = vrcp.pop %v660
    %v662 = vmul.f32 %v660, %v661
    %v663 = vsub.f32 1.0, %v662
    %v664 = vmul.f32 %v661, %v663
    %v665 = vadd.f32 %v661, %v664
    %vm666 = vweird.f32 %v660
    %vm667 = vweird.f32 %v661
    %vm668 = vmor %vm666, %vm667
    %v669 = vsel %vm668, %v661, %v665
    %v670 = vand.u32 2147483647, %v660
    %vm671 = vcmp.eq.f32.partialorder %v670, 8.507059e+37
    %v672 = vand.u32 %v660, 2147483648
    %v673 = vor.u32 1.1754944e-38, %v672
    %v674 = vsel %vm671, %v673, %v669
    %v675 = vmul.f32 1.0, %v674
    %v676 = vmul.f32 %v655, %v675
    %v677 = vadd.f32 %v530, %v676
    %v678 = vmul.f32 %v650, %v650
    %v679 = vmul.f32 %v563, %v647
    %v680 = vmul.f32 %v679, %v647
    %v681 = vmul.f32 %v657, %v649
    %v682 = vadd.f32 %v680, %v681
    %v683 = vmul.f32 %v566, %v648
    %v684 = vmul.f32 %v683, %v648
    %v685 = vadd.f32 %v682, %v684
    %v686 = vmul.f32 %v678, %v685
    %v687 = vmul.f32 %v686, %v675
    %v688 = vmul.f32 %v687, %v675
    %v689 = vmul.f32 %v677, %v628
    %690 = vmatpush.msra.mxu0 %v348
    %691 = vmatpush.msra.mxu0 %v347
    %692 = vmatpush.msra.mxu0 %v346
    %693 = vmatpush.msra.mxu0 %v345
    %694 = vmatpush.msra.mxu0 %v344
    %695 = vmatpush.msra.mxu0 %v343
    %696 = vmatpush.msra.mxu0 %v342
    %697 = vmatpush.msra.mxu0 %v341
    %698 = vmatpush.msra.mxu0 %v340
    %699 = vmatpush.msra.mxu0 %v339
    %700 = vmatpush.msra.mxu0 %v338
    %701 = vmatpush.msra.mxu0 %v337
    %702 = vmatpush.msra.mxu0 %v336
    %703 = vmatpush.msra.mxu0 %v335
    %704 = vmatpush.msra.mxu0 %v334
    %705 = vmatpush.msra.mxu0 %v333
    %706 = vmatmul.f32.gmra.mxu0 %v689
    %v707 = vpop.f32.mrf.mxu0
    %v708 = vadd.f32 0.0, %v707
    %709 = vdwg.mxu0
    %v710 = vmul.f32 %v688, %v628
    %711 = vmatpush.msra.mxu0 %v348
    %712 = vmatpush.msra.mxu0 %v347
    %713 = vmatpush.msra.mxu0 %v346
    %714 = vmatpush.msra.mxu0 %v345
    %715 = vmatpush.msra.mxu0 %v344
    %716 = vmatpush.msra.mxu0 %v343
    %717 = vmatpush.msra.mxu0 %v342
    %718 = vmatpush.msra.mxu0 %v341
    %719 = vmatpush.msra.mxu0 %v340
    %720 = vmatpush.msra.mxu0 %v339
    %721 = vmatpush.msra.mxu0 %v338
    %722 = vmatpush.msra.mxu0 %v337
    %723 = vmatpush.msra.mxu0 %v336
    %724 = vmatpush.msra.mxu0 %v335
    %725 = vmatpush.msra.mxu0 %v334
    %726 = vmatpush.msra.mxu0 %v333
    %727 = vmatmul.f32.gmra.mxu0 %v710
    %v728 = vpop.f32.mrf.mxu0
    %v729 = vadd.f32 0.0, %v728
    %730 = vdwg.mxu0
    %v731 = vlog2.pop %v729
    %v732 = vmul.f32 %v731, 0.6931472
    %vm733 = vcmp.ge.f32.partialorder %v121, -3.0
    %vm734 = vcmp.le.f32.partialorder %v121, 3.0
    %vm735 = vmand %vm733, %vm734
    %v736 = vsel %vm735, %v708, %v121
    %737 = vst.msk [vmem:[%s12] sm:$0xff] %vm569, %v736
    %v738 = vsel %vm735, %v732, 0.0
    %v739 = vsel %vm569, %v738, 0.0
    %740 = vadd.xlane.f32.xlu0 %v739
    %v741 = vpop.xlane.xlu0 %740
    %vm742 = vcmask 7168
    %743 = vst.msk [vmem:[%s13] sm:$0xff] %vm742, %v741
    // Predicated region
    $region70: #{nsf_ar_forward.1} parent=1 // pred_check
      _
    $region71: #{nsf_ar_forward.1} parent=1 // pred_check_branch
      %745 = sbr.rel (0) target = $region73
    $region72: #{nsf_ar_forward.1} parent=1 // pred_region
      _
    $region73: #{nsf_ar_forward.1} parent=1 // pred_fallthru
      _
    // Predicated region
    $region74: #{nsf_ar_forward.1} parent=1 // pred_check
      _
    $region75: #{nsf_ar_forward.1} parent=1 // pred_check_branch
      %747 = sbr.rel (0) target = $region77
    $region76: #{nsf_ar_forward.1} parent=1 // pred_region
      _
    $region77: #{nsf_ar_forward.1} parent=1 // pred_fallthru
      _
    // Predicated region
    $region78: #{nsf_ar_forward.1} parent=1 // pred_check
      _
    $region79: #{nsf_ar_forward.1} parent=1 // pred_check_branch
      %749 = sbr.rel (0) target = $region81
    $region80: #{nsf_ar_forward.1} parent=1 // pred_region
      _
    $region81: #{nsf_ar_forward.1} parent=1 // pred_fallthru
      _
    // Predicated region
    $region82: #{nsf_ar_forward.1} parent=1 // pred_check
      _
    $region83: #{nsf_ar_forward.1} parent=1 // pred_check_branch
      %751 = sbr.rel (0) target = $region85
    $region84: #{nsf_ar_forward.1} parent=1 // pred_region
      _
    $region85: #{nsf_ar_forward.1} parent=1 // pred_fallthru
      _
    %752 = vsyncpa [#allocation3], 1
    %753 = vsyncpa [#allocation5], 1
    %754 = vsyncpa [#allocation8], 1

</llo_original>
